<compile_context>
chip_gen: v7x
topology: tpu7x:2x2x1
jax: 0.10.0
libtpu: 0.0.40
codegen_flags: <defaults>
</compile_context>

<pallas_src>
import functools

import jax
import jax.numpy as jnp
from jax.experimental import pallas as pl
from jax.experimental.pallas import tpu as pltpu


def _split_pairs_kernel(x_ref, even_ref, odd_ref):
    # x_ref block: (bp, 2*u).  Row r = [even_unit_r (u elems), odd_unit_r (u elems)].
    u = even_ref.shape[-1]
    even_ref[...] = x_ref[:, :u]
    odd_ref[...] = x_ref[:, u:]


def _round_up(n, m):
    return ((n + m - 1) // m) * m


def _pick_block_rows(npairs, unit, itemsize):
    """Largest row-tile that (a) divides npairs, (b) is a multiple of 8 when it
    is a proper sub-tile, and (c) keeps one buffer set under ~12 MiB of VMEM
    (~24 MiB with default double buffering -> safe on v5e/v6e/v7x)."""
    lane_in = _round_up(2 * unit, 128)
    lane_out = _round_up(unit, 128)
    row_bytes = (lane_in + 2 * lane_out) * itemsize          # VMEM-padded lane widths
    budget = 12 * 1024 * 1024
    target = max(1, budget // row_bytes)
    if npairs <= target:
        return npairs                                        # whole array per step
    bp = (min(target, npairs) // 8) * 8
    while bp >= 8:
        if npairs % bp == 0:
            return bp
        bp -= 8
    # No legal sub-tile divides npairs -> fall back to one full-array block.
    return npairs


@functools.partial(jax.jit, static_argnames="horizontal")
def splitting_forward(x, horizontal: bool):
    """Pallas implementation of Splitting.forward on an NCHW tensor."""
    N, C, H, W = x.shape
    split = W if horizontal else H
    assert split % 2 == 0, "split axis must be even-sized"
    # TODO(synk): odd-sized split axis (PyTorch gives the even part one extra
    # row/column); not needed for the lifting backbone which uses even sizes.

    if horizontal:
        # Even/odd *elements* along W: a pair is 2 contiguous scalars.
        npairs, unit = N * C * H * (W // 2), 1
        out_shape4d = (N, C, H, W // 2)
        # TODO(synk): unit=1 keeps each pair in a 2-wide lane dim (vreg-sparse);
        # switch to a lane-compacting stride-2 slice once Mosaic supports
        # strided slices on the minormost (lane) dimension.
    else:
        # Even/odd *rows* along H: a pair is 2 contiguous rows of W scalars.
        npairs, unit = N * C * (H // 2), W
        out_shape4d = (N, C, H // 2, W)

    # Layout-preserving (free under jit) reshape: row r = [even_unit_r | odd_unit_r].
    x2 = x.reshape(npairs, 2 * unit)

    bp = _pick_block_rows(npairs, unit, jnp.dtype(x.dtype).itemsize)
    grid = (npairs // bp,)

    even2, odd2 = pl.pallas_call(
        _split_pairs_kernel,
        out_shape=(
            jax.ShapeDtypeStruct((npairs, unit), x.dtype),
            jax.ShapeDtypeStruct((npairs, unit), x.dtype),
        ),
        grid_spec=pltpu.PrefetchScalarGridSpec(
            num_scalar_prefetch=0,
            grid=grid,
            in_specs=[pl.BlockSpec((bp, 2 * unit), lambda i: (i, 0))],
            out_specs=(
                pl.BlockSpec((bp, unit), lambda i: (i, 0)),
                pl.BlockSpec((bp, unit), lambda i: (i, 0)),
            ),
        ),
        compiler_params=pltpu.CompilerParams(
            dimension_semantics=("parallel",),
            vmem_limit_bytes=32 * 1024 * 1024,
        ),
    )(x2)

    return even2.reshape(out_shape4d), odd2.reshape(out_shape4d)


if __name__ == "__main__":
    key = jax.random.PRNGKey(0)
    x = jax.random.normal(key, (2, 4, 16, 16), dtype=jnp.float32)  # NCHW

    ok = True
    for horizontal in (True, False):
        even, odd = splitting_forward(x, horizontal=horizontal)
        even = jax.block_until_ready(even)
        odd = jax.block_until_ready(odd)

        if horizontal:
            ref_even, ref_odd = x[:, :, :, ::2], x[:, :, :, 1::2]
        else:
            ref_even, ref_odd = x[:, :, ::2, :], x[:, :, 1::2, :]

        ok &= bool(jnp.array_equal(even, ref_even))
        ok &= bool(jnp.array_equal(odd, ref_odd))
        ok &= (even.shape == ref_even.shape) and (odd.shape == ref_odd.shape)
        ok &= (even.dtype == x.dtype) and (odd.dtype == x.dtype)

    if ok:
        print("KERNEL_OK")
    else:
        raise SystemExit("mismatch vs reference slicing")
</pallas_src>

<mosaic_0001>
module attributes {stable_mosaic.version = 11 : i64} {
  func.func @_split_pairs_kernel(%arg0: i32, %arg1: memref<1024x2xf32, #tpu.memory_space<vmem>>, %arg2: memref<1024x1xf32, #tpu.memory_space<vmem>>, %arg3: memref<1024x1xf32, #tpu.memory_space<vmem>>) attributes {dimension_semantics = [#tpu.dimension_semantics<parallel>], iteration_bounds = array<i64: 1>, scalar_prefetch = 0 : i64, scratch_operands = 0 : i64, tpu.core_type = #tpu.core_type<tc>, window_params = [{transform_indices = @transform_0, window_bounds = array<i64: 1024, 2>}, {transform_indices = @transform_1, window_bounds = array<i64: 1024, 1>}, {transform_indices = @transform_2, window_bounds = array<i64: 1024, 1>}]} {
    %c0 = arith.constant 0 : index
    %c0_0 = arith.constant 0 : index
    %0 = vector.load %arg1[%c0, %c0_0] : memref<1024x2xf32, #tpu.memory_space<vmem>>, vector<1024x1xf32>
    %c0_1 = arith.constant 0 : index
    %c0_2 = arith.constant 0 : index
    %1 = vector.load %arg2[%c0_1, %c0_2] : memref<1024x1xf32, #tpu.memory_space<vmem>>, vector<1024x1xf32>
    tpu.vector_store %arg2[%c0_1, %c0_2], %0 {strides = array<i32>} : memref<1024x1xf32, #tpu.memory_space<vmem>>, vector<1024x1xf32>,
    %c0_3 = arith.constant 0 : index
    %c1 = arith.constant 1 : index
    %2 = vector.load %arg1[%c0_3, %c1] : memref<1024x2xf32, #tpu.memory_space<vmem>>, vector<1024x1xf32>
    %c0_4 = arith.constant 0 : index
    %c0_5 = arith.constant 0 : index
    %3 = vector.load %arg3[%c0_4, %c0_5] : memref<1024x1xf32, #tpu.memory_space<vmem>>, vector<1024x1xf32>
    tpu.vector_store %arg3[%c0_4, %c0_5], %2 {strides = array<i32>} : memref<1024x1xf32, #tpu.memory_space<vmem>>, vector<1024x1xf32>,
    return
  }
  func.func @transform_0(%arg0: i32) -> (i32, i32) {
    %c0_i32 = arith.constant 0 : i32
    %c0_i32_0 = arith.constant 0 : i32
    return %arg0, %c0_i32 : i32, i32
  }
  func.func @transform_1(%arg0: i32) -> (i32, i32) {
    %c0_i32 = arith.constant 0 : i32
    %c0_i32_0 = arith.constant 0 : i32
    return %arg0, %c0_i32 : i32, i32
  }
  func.func @transform_2(%arg0: i32) -> (i32, i32) {
    %c0_i32 = arith.constant 0 : i32
    %c0_i32_0 = arith.constant 0 : i32
    return %arg0, %c0_i32 : i32, i32
  }
}

</mosaic_0001>

<llo_original>
// kernel: splitting_forward.1
$region0: #{splitting_forward.1}
  #allocation0 [shape = 'u32[]', space=smem, size = 0x4, offset = 0x4, fixed_abs, tag = 'smem constant byte address 0x4 - core index']
  #allocation1 [shape = 'u32[144,128]{1,0:T(1,128)}', space=vmem, size = 0x12000, scoped, tag = 'internal scratch']
  %s0 = inlined_call_operand.vmem [shape: f32[1024,2], index: 0, kind: input, shape index: {}]
  %s1 = inlined_call_operand.vmem [shape: f32[1024,1], index: 1, kind: output, shape index: {0}]
  %s2 = inlined_call_operand.vmem [shape: f32[1024,1], index: 2, kind: output, shape index: {1}]
  %3 = xla_tuple %s1, %s2
  %s4 = sld [smem:[#allocation0]]
  $region22: #{splitting_forward.1} parent=0
    _
  %s6 = ssub.s32 1, %s4
  %s7 = scalar_select 0, %s6, %s4
  // Predicated region
  $region2: #{splitting_forward.1} parent=0 // pred_check
    _
  $region3: #{splitting_forward.1} parent=0 // pred_check_branch
    %9 = sbr.rel (0) target = $region5
  $region4: #{splitting_forward.1} parent=0 // pred_region
    _
  $region5: #{splitting_forward.1} parent=0 // pred_fallthru
    _
  %v10 = vld [vmem:[%s0] sm:$0xff]
  %v11 = vld [vmem:[%s0 + $0x8] sm:$0xff]
  %v12 = vld [vmem:[%s0 + $0x10] sm:$0xff]
  %v13 = vld [vmem:[%s0 + $0x18] sm:$0xff]
  %v14 = vld [vmem:[%s0 + $0x20] sm:$0xff]
  %v15 = vld [vmem:[%s0 + $0x28] sm:$0xff]
  %v16 = vld [vmem:[%s0 + $0x30] sm:$0xff]
  %v17 = vld [vmem:[%s0 + $0x38] sm:$0xff]
  %v18 = vld [vmem:[%s0 + $0x40] sm:$0xff]
  %v19 = vld [vmem:[%s0 + $0x48] sm:$0xff]
  %v20 = vld [vmem:[%s0 + $0x50] sm:$0xff]
  %v21 = vld [vmem:[%s0 + $0x58] sm:$0xff]
  %v22 = vld [vmem:[%s0 + $0x60] sm:$0xff]
  %v23 = vld [vmem:[%s0 + $0x68] sm:$0xff]
  %v24 = vld [vmem:[%s0 + $0x70] sm:$0xff]
  %v25 = vld [vmem:[%s0 + $0x78] sm:$0xff]
  %v26 = vld [vmem:[%s0 + $0x80] sm:$0xff]
  %v27 = vld [vmem:[%s0 + $0x88] sm:$0xff]
  %v28 = vld [vmem:[%s0 + $0x90] sm:$0xff]
  %v29 = vld [vmem:[%s0 + $0x98] sm:$0xff]
  %v30 = vld [vmem:[%s0 + $0xa0] sm:$0xff]
  %v31 = vld [vmem:[%s0 + $0xa8] sm:$0xff]
  %v32 = vld [vmem:[%s0 + $0xb0] sm:$0xff]
  %v33 = vld [vmem:[%s0 + $0xb8] sm:$0xff]
  %v34 = vld [vmem:[%s0 + $0xc0] sm:$0xff]
  %v35 = vld [vmem:[%s0 + $0xc8] sm:$0xff]
  %v36 = vld [vmem:[%s0 + $0xd0] sm:$0xff]
  %v37 = vld [vmem:[%s0 + $0xd8] sm:$0xff]
  %v38 = vld [vmem:[%s0 + $0xe0] sm:$0xff]
  %v39 = vld [vmem:[%s0 + $0xe8] sm:$0xff]
  %v40 = vld [vmem:[%s0 + $0xf0] sm:$0xff]
  %v41 = vld [vmem:[%s0 + $0xf8] sm:$0xff]
  %v42 = vld [vmem:[%s0 + $0x100] sm:$0xff]
  %v43 = vld [vmem:[%s0 + $0x108] sm:$0xff]
  %v44 = vld [vmem:[%s0 + $0x110] sm:$0xff]
  %v45 = vld [vmem:[%s0 + $0x118] sm:$0xff]
  %v46 = vld [vmem:[%s0 + $0x120] sm:$0xff]
  %v47 = vld [vmem:[%s0 + $0x128] sm:$0xff]
  %v48 = vld [vmem:[%s0 + $0x130] sm:$0xff]
  %v49 = vld [vmem:[%s0 + $0x138] sm:$0xff]
  %v50 = vld [vmem:[%s0 + $0x140] sm:$0xff]
  %v51 = vld [vmem:[%s0 + $0x148] sm:$0xff]
  %v52 = vld [vmem:[%s0 + $0x150] sm:$0xff]
  %v53 = vld [vmem:[%s0 + $0x158] sm:$0xff]
  %v54 = vld [vmem:[%s0 + $0x160] sm:$0xff]
  %v55 = vld [vmem:[%s0 + $0x168] sm:$0xff]
  %v56 = vld [vmem:[%s0 + $0x170] sm:$0xff]
  %v57 = vld [vmem:[%s0 + $0x178] sm:$0xff]
  %v58 = vld [vmem:[%s0 + $0x180] sm:$0xff]
  %v59 = vld [vmem:[%s0 + $0x188] sm:$0xff]
  %v60 = vld [vmem:[%s0 + $0x190] sm:$0xff]
  %v61 = vld [vmem:[%s0 + $0x198] sm:$0xff]
  %v62 = vld [vmem:[%s0 + $0x1a0] sm:$0xff]
  %v63 = vld [vmem:[%s0 + $0x1a8] sm:$0xff]
  %v64 = vld [vmem:[%s0 + $0x1b0] sm:$0xff]
  %v65 = vld [vmem:[%s0 + $0x1b8] sm:$0xff]
  %v66 = vld [vmem:[%s0 + $0x1c0] sm:$0xff]
  %v67 = vld [vmem:[%s0 + $0x1c8] sm:$0xff]
  %v68 = vld [vmem:[%s0 + $0x1d0] sm:$0xff]
  %v69 = vld [vmem:[%s0 + $0x1d8] sm:$0xff]
  %v70 = vld [vmem:[%s0 + $0x1e0] sm:$0xff]
  %v71 = vld [vmem:[%s0 + $0x1e8] sm:$0xff]
  %v72 = vld [vmem:[%s0 + $0x1f0] sm:$0xff]
  %v73 = vld [vmem:[%s0 + $0x1f8] sm:$0xff]
  %v74 = vld [vmem:[%s0 + $0x200] sm:$0xff]
  %v75 = vld [vmem:[%s0 + $0x208] sm:$0xff]
  %v76 = vld [vmem:[%s0 + $0x210] sm:$0xff]
  %v77 = vld [vmem:[%s0 + $0x218] sm:$0xff]
  %v78 = vld [vmem:[%s0 + $0x220] sm:$0xff]
  %v79 = vld [vmem:[%s0 + $0x228] sm:$0xff]
  %v80 = vld [vmem:[%s0 + $0x230] sm:$0xff]
  %v81 = vld [vmem:[%s0 + $0x238] sm:$0xff]
  %v82 = vld [vmem:[%s0 + $0x240] sm:$0xff]
  %v83 = vld [vmem:[%s0 + $0x248] sm:$0xff]
  %v84 = vld [vmem:[%s0 + $0x250] sm:$0xff]
  %v85 = vld [vmem:[%s0 + $0x258] sm:$0xff]
  %v86 = vld [vmem:[%s0 + $0x260] sm:$0xff]
  %v87 = vld [vmem:[%s0 + $0x268] sm:$0xff]
  %v88 = vld [vmem:[%s0 + $0x270] sm:$0xff]
  %v89 = vld [vmem:[%s0 + $0x278] sm:$0xff]
  %v90 = vld [vmem:[%s0 + $0x280] sm:$0xff]
  %v91 = vld [vmem:[%s0 + $0x288] sm:$0xff]
  %v92 = vld [vmem:[%s0 + $0x290] sm:$0xff]
  %v93 = vld [vmem:[%s0 + $0x298] sm:$0xff]
  %v94 = vld [vmem:[%s0 + $0x2a0] sm:$0xff]
  %v95 = vld [vmem:[%s0 + $0x2a8] sm:$0xff]
  %v96 = vld [vmem:[%s0 + $0x2b0] sm:$0xff]
  %v97 = vld [vmem:[%s0 + $0x2b8] sm:$0xff]
  %v98 = vld [vmem:[%s0 + $0x2c0] sm:$0xff]
  %v99 = vld [vmem:[%s0 + $0x2c8] sm:$0xff]
  %v100 = vld [vmem:[%s0 + $0x2d0] sm:$0xff]
  %v101 = vld [vmem:[%s0 + $0x2d8] sm:$0xff]
  %v102 = vld [vmem:[%s0 + $0x2e0] sm:$0xff]
  %v103 = vld [vmem:[%s0 + $0x2e8] sm:$0xff]
  %v104 = vld [vmem:[%s0 + $0x2f0] sm:$0xff]
  %v105 = vld [vmem:[%s0 + $0x2f8] sm:$0xff]
  %v106 = vld [vmem:[%s0 + $0x300] sm:$0xff]
  %v107 = vld [vmem:[%s0 + $0x308] sm:$0xff]
  %v108 = vld [vmem:[%s0 + $0x310] sm:$0xff]
  %v109 = vld [vmem:[%s0 + $0x318] sm:$0xff]
  %v110 = vld [vmem:[%s0 + $0x320] sm:$0xff]
  %v111 = vld [vmem:[%s0 + $0x328] sm:$0xff]
  %v112 = vld [vmem:[%s0 + $0x330] sm:$0xff]
  %v113 = vld [vmem:[%s0 + $0x338] sm:$0xff]
  %v114 = vld [vmem:[%s0 + $0x340] sm:$0xff]
  %v115 = vld [vmem:[%s0 + $0x348] sm:$0xff]
  %v116 = vld [vmem:[%s0 + $0x350] sm:$0xff]
  %v117 = vld [vmem:[%s0 + $0x358] sm:$0xff]
  %v118 = vld [vmem:[%s0 + $0x360] sm:$0xff]
  %v119 = vld [vmem:[%s0 + $0x368] sm:$0xff]
  %v120 = vld [vmem:[%s0 + $0x370] sm:$0xff]
  %v121 = vld [vmem:[%s0 + $0x378] sm:$0xff]
  %v122 = vld [vmem:[%s0 + $0x380] sm:$0xff]
  %v123 = vld [vmem:[%s0 + $0x388] sm:$0xff]
  %v124 = vld [vmem:[%s0 + $0x390] sm:$0xff]
  %v125 = vld [vmem:[%s0 + $0x398] sm:$0xff]
  %v126 = vld [vmem:[%s0 + $0x3a0] sm:$0xff]
  %v127 = vld [vmem:[%s0 + $0x3a8] sm:$0xff]
  %v128 = vld [vmem:[%s0 + $0x3b0] sm:$0xff]
  %v129 = vld [vmem:[%s0 + $0x3b8] sm:$0xff]
  %v130 = vld [vmem:[%s0 + $0x3c0] sm:$0xff]
  %v131 = vld [vmem:[%s0 + $0x3c8] sm:$0xff]
  %v132 = vld [vmem:[%s0 + $0x3d0] sm:$0xff]
  %v133 = vld [vmem:[%s0 + $0x3d8] sm:$0xff]
  %v134 = vld [vmem:[%s0 + $0x3e0] sm:$0xff]
  %v135 = vld [vmem:[%s0 + $0x3e8] sm:$0xff]
  %v136 = vld [vmem:[%s0 + $0x3f0] sm:$0xff]
  %v137 = vld [vmem:[%s0 + $0x3f8] sm:$0xff]
  %vm138 = vcmask 7168
  %139 = vst.msk [vmem:[%s1] sm:$0xff] %vm138, %v10
  %140 = vst.msk [vmem:[%s1 + $0x8] sm:$0xff] %vm138, %v11
  %141 = vst.msk [vmem:[%s1 + $0x10] sm:$0xff] %vm138, %v12
  %142 = vst.msk [vmem:[%s1 + $0x18] sm:$0xff] %vm138, %v13
  %143 = vst.msk [vmem:[%s1 + $0x20] sm:$0xff] %vm138, %v14
  %144 = vst.msk [vmem:[%s1 + $0x28] sm:$0xff] %vm138, %v15
  %145 = vst.msk [vmem:[%s1 + $0x30] sm:$0xff] %vm138, %v16
  %146 = vst.msk [vmem:[%s1 + $0x38] sm:$0xff] %vm138, %v17
  %147 = vst.msk [vmem:[%s1 + $0x40] sm:$0xff] %vm138, %v18
  %148 = vst.msk [vmem:[%s1 + $0x48] sm:$0xff] %vm138, %v19
  %149 = vst.msk [vmem:[%s1 + $0x50] sm:$0xff] %vm138, %v20
  %150 = vst.msk [vmem:[%s1 + $0x58] sm:$0xff] %vm138, %v21
  %151 = vst.msk [vmem:[%s1 + $0x60] sm:$0xff] %vm138, %v22
  %152 = vst.msk [vmem:[%s1 + $0x68] sm:$0xff] %vm138, %v23
  %153 = vst.msk [vmem:[%s1 + $0x70] sm:$0xff] %vm138, %v24
  %154 = vst.msk [vmem:[%s1 + $0x78] sm:$0xff] %vm138, %v25
  %155 = vst.msk [vmem:[%s1 + $0x80] sm:$0xff] %vm138, %v26
  %156 = vst.msk [vmem:[%s1 + $0x88] sm:$0xff] %vm138, %v27
  %157 = vst.msk [vmem:[%s1 + $0x90] sm:$0xff] %vm138, %v28
  %158 = vst.msk [vmem:[%s1 + $0x98] sm:$0xff] %vm138, %v29
  %159 = vst.msk [vmem:[%s1 + $0xa0] sm:$0xff] %vm138, %v30
  %160 = vst.msk [vmem:[%s1 + $0xa8] sm:$0xff] %vm138, %v31
  %161 = vst.msk [vmem:[%s1 + $0xb0] sm:$0xff] %vm138, %v32
  %162 = vst.msk [vmem:[%s1 + $0xb8] sm:$0xff] %vm138, %v33
  %163 = vst.msk [vmem:[%s1 + $0xc0] sm:$0xff] %vm138, %v34
  %164 = vst.msk [vmem:[%s1 + $0xc8] sm:$0xff] %vm138, %v35
  %165 = vst.msk [vmem:[%s1 + $0xd0] sm:$0xff] %vm138, %v36
  %166 = vst.msk [vmem:[%s1 + $0xd8] sm:$0xff] %vm138, %v37
  %167 = vst.msk [vmem:[%s1 + $0xe0] sm:$0xff] %vm138, %v38
  %168 = vst.msk [vmem:[%s1 + $0xe8] sm:$0xff] %vm138, %v39
  %169 = vst.msk [vmem:[%s1 + $0xf0] sm:$0xff] %vm138, %v40
  %170 = vst.msk [vmem:[%s1 + $0xf8] sm:$0xff] %vm138, %v41
  %171 = vst.msk [vmem:[%s1 + $0x100] sm:$0xff] %vm138, %v42
  %172 = vst.msk [vmem:[%s1 + $0x108] sm:$0xff] %vm138, %v43
  %173 = vst.msk [vmem:[%s1 + $0x110] sm:$0xff] %vm138, %v44
  %174 = vst.msk [vmem:[%s1 + $0x118] sm:$0xff] %vm138, %v45
  %175 = vst.msk [vmem:[%s1 + $0x120] sm:$0xff] %vm138, %v46
  %176 = vst.msk [vmem:[%s1 + $0x128] sm:$0xff] %vm138, %v47
  %177 = vst.msk [vmem:[%s1 + $0x130] sm:$0xff] %vm138, %v48
  %178 = vst.msk [vmem:[%s1 + $0x138] sm:$0xff] %vm138, %v49
  %179 = vst.msk [vmem:[%s1 + $0x140] sm:$0xff] %vm138, %v50
  %180 = vst.msk [vmem:[%s1 + $0x148] sm:$0xff] %vm138, %v51
  %181 = vst.msk [vmem:[%s1 + $0x150] sm:$0xff] %vm138, %v52
  %182 = vst.msk [vmem:[%s1 + $0x158] sm:$0xff] %vm138, %v53
  %183 = vst.msk [vmem:[%s1 + $0x160] sm:$0xff] %vm138, %v54
  %184 = vst.msk [vmem:[%s1 + $0x168] sm:$0xff] %vm138, %v55
  %185 = vst.msk [vmem:[%s1 + $0x170] sm:$0xff] %vm138, %v56
  %186 = vst.msk [vmem:[%s1 + $0x178] sm:$0xff] %vm138, %v57
  %187 = vst.msk [vmem:[%s1 + $0x180] sm:$0xff] %vm138, %v58
  %188 = vst.msk [vmem:[%s1 + $0x188] sm:$0xff] %vm138, %v59
  %189 = vst.msk [vmem:[%s1 + $0x190] sm:$0xff] %vm138, %v60
  %190 = vst.msk [vmem:[%s1 + $0x198] sm:$0xff] %vm138, %v61
  %191 = vst.msk [vmem:[%s1 + $0x1a0] sm:$0xff] %vm138, %v62
  %192 = vst.msk [vmem:[%s1 + $0x1a8] sm:$0xff] %vm138, %v63
  %193 = vst.msk [vmem:[%s1 + $0x1b0] sm:$0xff] %vm138, %v64
  %194 = vst.msk [vmem:[%s1 + $0x1b8] sm:$0xff] %vm138, %v65
  %195 = vst.msk [vmem:[%s1 + $0x1c0] sm:$0xff] %vm138, %v66
  %196 = vst.msk [vmem:[%s1 + $0x1c8] sm:$0xff] %vm138, %v67
  %197 = vst.msk [vmem:[%s1 + $0x1d0] sm:$0xff] %vm138, %v68
  %198 = vst.msk [vmem:[%s1 + $0x1d8] sm:$0xff] %vm138, %v69
  %199 = vst.msk [vmem:[%s1 + $0x1e0] sm:$0xff] %vm138, %v70
  %200 = vst.msk [vmem:[%s1 + $0x1e8] sm:$0xff] %vm138, %v71
  %201 = vst.msk [vmem:[%s1 + $0x1f0] sm:$0xff] %vm138, %v72
  %202 = vst.msk [vmem:[%s1 + $0x1f8] sm:$0xff] %vm138, %v73
  %203 = vst.msk [vmem:[%s1 + $0x200] sm:$0xff] %vm138, %v74
  %204 = vst.msk [vmem:[%s1 + $0x208] sm:$0xff] %vm138, %v75
  %205 = vst.msk [vmem:[%s1 + $0x210] sm:$0xff] %vm138, %v76
  %206 = vst.msk [vmem:[%s1 + $0x218] sm:$0xff] %vm138, %v77
  %207 = vst.msk [vmem:[%s1 + $0x220] sm:$0xff] %vm138, %v78
  %208 = vst.msk [vmem:[%s1 + $0x228] sm:$0xff] %vm138, %v79
  %209 = vst.msk [vmem:[%s1 + $0x230] sm:$0xff] %vm138, %v80
  %210 = vst.msk [vmem:[%s1 + $0x238] sm:$0xff] %vm138, %v81
  %211 = vst.msk [vmem:[%s1 + $0x240] sm:$0xff] %vm138, %v82
  %212 = vst.msk [vmem:[%s1 + $0x248] sm:$0xff] %vm138, %v83
  %213 = vst.msk [vmem:[%s1 + $0x250] sm:$0xff] %vm138, %v84
  %214 = vst.msk [vmem:[%s1 + $0x258] sm:$0xff] %vm138, %v85
  %215 = vst.msk [vmem:[%s1 + $0x260] sm:$0xff] %vm138, %v86
  %216 = vst.msk [vmem:[%s1 + $0x268] sm:$0xff] %vm138, %v87
  %217 = vst.msk [vmem:[%s1 + $0x270] sm:$0xff] %vm138, %v88
  %218 = vst.msk [vmem:[%s1 + $0x278] sm:$0xff] %vm138, %v89
  %219 = vst.msk [vmem:[%s1 + $0x280] sm:$0xff] %vm138, %v90
  %220 = vst.msk [vmem:[%s1 + $0x288] sm:$0xff] %vm138, %v91
  %221 = vst.msk [vmem:[%s1 + $0x290] sm:$0xff] %vm138, %v92
  %222 = vst.msk [vmem:[%s1 + $0x298] sm:$0xff] %vm138, %v93
  %223 = vst.msk [vmem:[%s1 + $0x2a0] sm:$0xff] %vm138, %v94
  %224 = vst.msk [vmem:[%s1 + $0x2a8] sm:$0xff] %vm138, %v95
  %225 = vst.msk [vmem:[%s1 + $0x2b0] sm:$0xff] %vm138, %v96
  %226 = vst.msk [vmem:[%s1 + $0x2b8] sm:$0xff] %vm138, %v97
  %227 = vst.msk [vmem:[%s1 + $0x2c0] sm:$0xff] %vm138, %v98
  %228 = vst.msk [vmem:[%s1 + $0x2c8] sm:$0xff] %vm138, %v99
  %229 = vst.msk [vmem:[%s1 + $0x2d0] sm:$0xff] %vm138, %v100
  %230 = vst.msk [vmem:[%s1 + $0x2d8] sm:$0xff] %vm138, %v101
  %231 = vst.msk [vmem:[%s1 + $0x2e0] sm:$0xff] %vm138, %v102
  %232 = vst.msk [vmem:[%s1 + $0x2e8] sm:$0xff] %vm138, %v103
  %233 = vst.msk [vmem:[%s1 + $0x2f0] sm:$0xff] %vm138, %v104
  %234 = vst.msk [vmem:[%s1 + $0x2f8] sm:$0xff] %vm138, %v105
  %235 = vst.msk [vmem:[%s1 + $0x300] sm:$0xff] %vm138, %v106
  %236 = vst.msk [vmem:[%s1 + $0x308] sm:$0xff] %vm138, %v107
  %237 = vst.msk [vmem:[%s1 + $0x310] sm:$0xff] %vm138, %v108
  %238 = vst.msk [vmem:[%s1 + $0x318] sm:$0xff] %vm138, %v109
  %239 = vst.msk [vmem:[%s1 + $0x320] sm:$0xff] %vm138, %v110
  %240 = vst.msk [vmem:[%s1 + $0x328] sm:$0xff] %vm138, %v111
  %241 = vst.msk [vmem:[%s1 + $0x330] sm:$0xff] %vm138, %v112
  %242 = vst.msk [vmem:[%s1 + $0x338] sm:$0xff] %vm138, %v113
  %243 = vst.msk [vmem:[%s1 + $0x340] sm:$0xff] %vm138, %v114
  %244 = vst.msk [vmem:[%s1 + $0x348] sm:$0xff] %vm138, %v115
  %245 = vst.msk [vmem:[%s1 + $0x350] sm:$0xff] %vm138, %v116
  %246 = vst.msk [vmem:[%s1 + $0x358] sm:$0xff] %vm138, %v117
  %247 = vst.msk [vmem:[%s1 + $0x360] sm:$0xff] %vm138, %v118
  %248 = vst.msk [vmem:[%s1 + $0x368] sm:$0xff] %vm138, %v119
  %249 = vst.msk [vmem:[%s1 + $0x370] sm:$0xff] %vm138, %v120
  %250 = vst.msk [vmem:[%s1 + $0x378] sm:$0xff] %vm138, %v121
  %251 = vst.msk [vmem:[%s1 + $0x380] sm:$0xff] %vm138, %v122
  %252 = vst.msk [vmem:[%s1 + $0x388] sm:$0xff] %vm138, %v123
  %253 = vst.msk [vmem:[%s1 + $0x390] sm:$0xff] %vm138, %v124
  %254 = vst.msk [vmem:[%s1 + $0x398] sm:$0xff] %vm138, %v125
  %255 = vst.msk [vmem:[%s1 + $0x3a0] sm:$0xff] %vm138, %v126
  %256 = vst.msk [vmem:[%s1 + $0x3a8] sm:$0xff] %vm138, %v127
  %257 = vst.msk [vmem:[%s1 + $0x3b0] sm:$0xff] %vm138, %v128
  %258 = vst.msk [vmem:[%s1 + $0x3b8] sm:$0xff] %vm138, %v129
  %259 = vst.msk [vmem:[%s1 + $0x3c0] sm:$0xff] %vm138, %v130
  %260 = vst.msk [vmem:[%s1 + $0x3c8] sm:$0xff] %vm138, %v131
  %261 = vst.msk [vmem:[%s1 + $0x3d0] sm:$0xff] %vm138, %v132
  %262 = vst.msk [vmem:[%s1 + $0x3d8] sm:$0xff] %vm138, %v133
  %263 = vst.msk [vmem:[%s1 + $0x3e0] sm:$0xff] %vm138, %v134
  %264 = vst.msk [vmem:[%s1 + $0x3e8] sm:$0xff] %vm138, %v135
  %265 = vst.msk [vmem:[%s1 + $0x3f0] sm:$0xff] %vm138, %v136
  %266 = vst.msk [vmem:[%s1 + $0x3f8] sm:$0xff] %vm138, %v137
  %v267 = vld [vmem:[%s0] sm:$0xff]
  %v268 = vld [vmem:[%s0 + $0x8] sm:$0xff]
  %v269 = vld [vmem:[%s0 + $0x10] sm:$0xff]
  %v270 = vld [vmem:[%s0 + $0x18] sm:$0xff]
  %v271 = vld [vmem:[%s0 + $0x20] sm:$0xff]
  %v272 = vld [vmem:[%s0 + $0x28] sm:$0xff]
  %v273 = vld [vmem:[%s0 + $0x30] sm:$0xff]
  %v274 = vld [vmem:[%s0 + $0x38] sm:$0xff]
  %v275 = vld [vmem:[%s0 + $0x40] sm:$0xff]
  %v276 = vld [vmem:[%s0 + $0x48] sm:$0xff]
  %v277 = vld [vmem:[%s0 + $0x50] sm:$0xff]
  %v278 = vld [vmem:[%s0 + $0x58] sm:$0xff]
  %v279 = vld [vmem:[%s0 + $0x60] sm:$0xff]
  %v280 = vld [vmem:[%s0 + $0x68] sm:$0xff]
  %v281 = vld [vmem:[%s0 + $0x70] sm:$0xff]
  %v282 = vld [vmem:[%s0 + $0x78] sm:$0xff]
  %v283 = vld [vmem:[%s0 + $0x80] sm:$0xff]
  %v284 = vld [vmem:[%s0 + $0x88] sm:$0xff]
  %v285 = vld [vmem:[%s0 + $0x90] sm:$0xff]
  %v286 = vld [vmem:[%s0 + $0x98] sm:$0xff]
  %v287 = vld [vmem:[%s0 + $0xa0] sm:$0xff]
  %v288 = vld [vmem:[%s0 + $0xa8] sm:$0xff]
  %v289 = vld [vmem:[%s0 + $0xb0] sm:$0xff]
  %v290 = vld [vmem:[%s0 + $0xb8] sm:$0xff]
  %v291 = vld [vmem:[%s0 + $0xc0] sm:$0xff]
  %v292 = vld [vmem:[%s0 + $0xc8] sm:$0xff]
  %v293 = vld [vmem:[%s0 + $0xd0] sm:$0xff]
  %v294 = vld [vmem:[%s0 + $0xd8] sm:$0xff]
  %v295 = vld [vmem:[%s0 + $0xe0] sm:$0xff]
  %v296 = vld [vmem:[%s0 + $0xe8] sm:$0xff]
  %v297 = vld [vmem:[%s0 + $0xf0] sm:$0xff]
  %v298 = vld [vmem:[%s0 + $0xf8] sm:$0xff]
  %v299 = vld [vmem:[%s0 + $0x100] sm:$0xff]
  %v300 = vld [vmem:[%s0 + $0x108] sm:$0xff]
  %v301 = vld [vmem:[%s0 + $0x110] sm:$0xff]
  %v302 = vld [vmem:[%s0 + $0x118] sm:$0xff]
  %v303 = vld [vmem:[%s0 + $0x120] sm:$0xff]
  %v304 = vld [vmem:[%s0 + $0x128] sm:$0xff]
  %v305 = vld [vmem:[%s0 + $0x130] sm:$0xff]
  %v306 = vld [vmem:[%s0 + $0x138] sm:$0xff]
  %v307 = vld [vmem:[%s0 + $0x140] sm:$0xff]
  %v308 = vld [vmem:[%s0 + $0x148] sm:$0xff]
  %v309 = vld [vmem:[%s0 + $0x150] sm:$0xff]
  %v310 = vld [vmem:[%s0 + $0x158] sm:$0xff]
  %v311 = vld [vmem:[%s0 + $0x160] sm:$0xff]
  %v312 = vld [vmem:[%s0 + $0x168] sm:$0xff]
  %v313 = vld [vmem:[%s0 + $0x170] sm:$0xff]
  %v314 = vld [vmem:[%s0 + $0x178] sm:$0xff]
  %v315 = vld [vmem:[%s0 + $0x180] sm:$0xff]
  %v316 = vld [vmem:[%s0 + $0x188] sm:$0xff]
  %v317 = vld [vmem:[%s0 + $0x190] sm:$0xff]
  %v318 = vld [vmem:[%s0 + $0x198] sm:$0xff]
  %v319 = vld [vmem:[%s0 + $0x1a0] sm:$0xff]
  %v320 = vld [vmem:[%s0 + $0x1a8] sm:$0xff]
  %v321 = vld [vmem:[%s0 + $0x1b0] sm:$0xff]
  %v322 = vld [vmem:[%s0 + $0x1b8] sm:$0xff]
  %v323 = vld [vmem:[%s0 + $0x1c0] sm:$0xff]
  %v324 = vld [vmem:[%s0 + $0x1c8] sm:$0xff]
  %v325 = vld [vmem:[%s0 + $0x1d0] sm:$0xff]
  %v326 = vld [vmem:[%s0 + $0x1d8] sm:$0xff]
  %v327 = vld [vmem:[%s0 + $0x1e0] sm:$0xff]
  %v328 = vld [vmem:[%s0 + $0x1e8] sm:$0xff]
  %v329 = vld [vmem:[%s0 + $0x1f0] sm:$0xff]
  %v330 = vld [vmem:[%s0 + $0x1f8] sm:$0xff]
  %v331 = vld [vmem:[%s0 + $0x200] sm:$0xff]
  %v332 = vld [vmem:[%s0 + $0x208] sm:$0xff]
  %v333 = vld [vmem:[%s0 + $0x210] sm:$0xff]
  %v334 = vld [vmem:[%s0 + $0x218] sm:$0xff]
  %v335 = vld [vmem:[%s0 + $0x220] sm:$0xff]
  %v336 = vld [vmem:[%s0 + $0x228] sm:$0xff]
  %v337 = vld [vmem:[%s0 + $0x230] sm:$0xff]
  %v338 = vld [vmem:[%s0 + $0x238] sm:$0xff]
  %v339 = vld [vmem:[%s0 + $0x240] sm:$0xff]
  %v340 = vld [vmem:[%s0 + $0x248] sm:$0xff]
  %v341 = vld [vmem:[%s0 + $0x250] sm:$0xff]
  %v342 = vld [vmem:[%s0 + $0x258] sm:$0xff]
  %v343 = vld [vmem:[%s0 + $0x260] sm:$0xff]
  %v344 = vld [vmem:[%s0 + $0x268] sm:$0xff]
  %v345 = vld [vmem:[%s0 + $0x270] sm:$0xff]
  %v346 = vld [vmem:[%s0 + $0x278] sm:$0xff]
  %v347 = vld [vmem:[%s0 + $0x280] sm:$0xff]
  %v348 = vld [vmem:[%s0 + $0x288] sm:$0xff]
  %v349 = vld [vmem:[%s0 + $0x290] sm:$0xff]
  %v350 = vld [vmem:[%s0 + $0x298] sm:$0xff]
  %v351 = vld [vmem:[%s0 + $0x2a0] sm:$0xff]
  %v352 = vld [vmem:[%s0 + $0x2a8] sm:$0xff]
  %v353 = vld [vmem:[%s0 + $0x2b0] sm:$0xff]
  %v354 = vld [vmem:[%s0 + $0x2b8] sm:$0xff]
  %v355 = vld [vmem:[%s0 + $0x2c0] sm:$0xff]
  %v356 = vld [vmem:[%s0 + $0x2c8] sm:$0xff]
  %v357 = vld [vmem:[%s0 + $0x2d0] sm:$0xff]
  %v358 = vld [vmem:[%s0 + $0x2d8] sm:$0xff]
  %v359 = vld [vmem:[%s0 + $0x2e0] sm:$0xff]
  %v360 = vld [vmem:[%s0 + $0x2e8] sm:$0xff]
  %v361 = vld [vmem:[%s0 + $0x2f0] sm:$0xff]
  %v362 = vld [vmem:[%s0 + $0x2f8] sm:$0xff]
  %v363 = vld [vmem:[%s0 + $0x300] sm:$0xff]
  %v364 = vld [vmem:[%s0 + $0x308] sm:$0xff]
  %v365 = vld [vmem:[%s0 + $0x310] sm:$0xff]
  %v366 = vld [vmem:[%s0 + $0x318] sm:$0xff]
  %v367 = vld [vmem:[%s0 + $0x320] sm:$0xff]
  %v368 = vld [vmem:[%s0 + $0x328] sm:$0xff]
  %v369 = vld [vmem:[%s0 + $0x330] sm:$0xff]
  %v370 = vld [vmem:[%s0 + $0x338] sm:$0xff]
  %v371 = vld [vmem:[%s0 + $0x340] sm:$0xff]
  %v372 = vld [vmem:[%s0 + $0x348] sm:$0xff]
  %v373 = vld [vmem:[%s0 + $0x350] sm:$0xff]
  %v374 = vld [vmem:[%s0 + $0x358] sm:$0xff]
  %v375 = vld [vmem:[%s0 + $0x360] sm:$0xff]
  %v376 = vld [vmem:[%s0 + $0x368] sm:$0xff]
  %v377 = vld [vmem:[%s0 + $0x370] sm:$0xff]
  %v378 = vld [vmem:[%s0 + $0x378] sm:$0xff]
  %v379 = vld [vmem:[%s0 + $0x380] sm:$0xff]
  %v380 = vld [vmem:[%s0 + $0x388] sm:$0xff]
  %v381 = vld [vmem:[%s0 + $0x390] sm:$0xff]
  %v382 = vld [vmem:[%s0 + $0x398] sm:$0xff]
  %v383 = vld [vmem:[%s0 + $0x3a0] sm:$0xff]
  %v384 = vld [vmem:[%s0 + $0x3a8] sm:$0xff]
  %v385 = vld [vmem:[%s0 + $0x3b0] sm:$0xff]
  %v386 = vld [vmem:[%s0 + $0x3b8] sm:$0xff]
  %v387 = vld [vmem:[%s0 + $0x3c0] sm:$0xff]
  %v388 = vld [vmem:[%s0 + $0x3c8] sm:$0xff]
  %v389 = vld [vmem:[%s0 + $0x3d0] sm:$0xff]
  %v390 = vld [vmem:[%s0 + $0x3d8] sm:$0xff]
  %v391 = vld [vmem:[%s0 + $0x3e0] sm:$0xff]
  %v392 = vld [vmem:[%s0 + $0x3e8] sm:$0xff]
  %v393 = vld [vmem:[%s0 + $0x3f0] sm:$0xff]
  %v394 = vld [vmem:[%s0 + $0x3f8] sm:$0xff]
  %523 = vrot.lane.b32.xlu0 %v267, 127
  %v524 = vpop.permute.xlu0 %523
  %525 = vrot.lane.b32.xlu0 %v268, 127
  %v526 = vpop.permute.xlu0 %525
  %527 = vrot.lane.b32.xlu0 %v269, 127
  %v528 = vpop.permute.xlu0 %527
  %529 = vrot.lane.b32.xlu0 %v270, 127
  %v530 = vpop.permute.xlu0 %529
  %531 = vrot.lane.b32.xlu0 %v271, 127
  %v532 = vpop.permute.xlu0 %531
  %533 = vrot.lane.b32.xlu0 %v272, 127
  %v534 = vpop.permute.xlu0 %533
  %535 = vrot.lane.b32.xlu0 %v273, 127
  %v536 = vpop.permute.xlu0 %535
  %537 = vrot.lane.b32.xlu0 %v274, 127
  %v538 = vpop.permute.xlu0 %537
  %539 = vrot.lane.b32.xlu0 %v275, 127
  %v540 = vpop.permute.xlu0 %539
  %541 = vrot.lane.b32.xlu0 %v276, 127
  %v542 = vpop.permute.xlu0 %541
  %543 = vrot.lane.b32.xlu0 %v277, 127
  %v544 = vpop.permute.xlu0 %543
  %545 = vrot.lane.b32.xlu0 %v278, 127
  %v546 = vpop.permute.xlu0 %545
  %547 = vrot.lane.b32.xlu0 %v279, 127
  %v548 = vpop.permute.xlu0 %547
  %549 = vrot.lane.b32.xlu0 %v280, 127
  %v550 = vpop.permute.xlu0 %549
  %551 = vrot.lane.b32.xlu0 %v281, 127
  %v552 = vpop.permute.xlu0 %551
  %553 = vrot.lane.b32.xlu0 %v282, 127
  %v554 = vpop.permute.xlu0 %553
  %555 = vrot.lane.b32.xlu0 %v283, 127
  %v556 = vpop.permute.xlu0 %555
  %557 = vrot.lane.b32.xlu0 %v284, 127
  %v558 = vpop.permute.xlu0 %557
  %559 = vrot.lane.b32.xlu0 %v285, 127
  %v560 = vpop.permute.xlu0 %559
  %561 = vrot.lane.b32.xlu0 %v286, 127
  %v562 = vpop.permute.xlu0 %561
  %563 = vrot.lane.b32.xlu0 %v287, 127
  %v564 = vpop.permute.xlu0 %563
  %565 = vrot.lane.b32.xlu0 %v288, 127
  %v566 = vpop.permute.xlu0 %565
  %567 = vrot.lane.b32.xlu0 %v289, 127
  %v568 = vpop.permute.xlu0 %567
  %569 = vrot.lane.b32.xlu0 %v290, 127
  %v570 = vpop.permute.xlu0 %569
  %571 = vrot.lane.b32.xlu0 %v291, 127
  %v572 = vpop.permute.xlu0 %571
  %573 = vrot.lane.b32.xlu0 %v292, 127
  %v574 = vpop.permute.xlu0 %573
  %575 = vrot.lane.b32.xlu0 %v293, 127
  %v576 = vpop.permute.xlu0 %575
  %577 = vrot.lane.b32.xlu0 %v294, 127
  %v578 = vpop.permute.xlu0 %577
  %579 = vrot.lane.b32.xlu0 %v295, 127
  %v580 = vpop.permute.xlu0 %579
  %581 = vrot.lane.b32.xlu0 %v296, 127
  %v582 = vpop.permute.xlu0 %581
  %583 = vrot.lane.b32.xlu0 %v297, 127
  %v584 = vpop.permute.xlu0 %583
  %585 = vrot.lane.b32.xlu0 %v298, 127
  %v586 = vpop.permute.xlu0 %585
  %587 = vrot.lane.b32.xlu0 %v299, 127
  %v588 = vpop.permute.xlu0 %587
  %589 = vrot.lane.b32.xlu0 %v300, 127
  %v590 = vpop.permute.xlu0 %589
  %591 = vrot.lane.b32.xlu0 %v301, 127
  %v592 = vpop.permute.xlu0 %591
  %593 = vrot.lane.b32.xlu0 %v302, 127
  %v594 = vpop.permute.xlu0 %593
  %595 = vrot.lane.b32.xlu0 %v303, 127
  %v596 = vpop.permute.xlu0 %595
  %597 = vrot.lane.b32.xlu0 %v304, 127
  %v598 = vpop.permute.xlu0 %597
  %599 = vrot.lane.b32.xlu0 %v305, 127
  %v600 = vpop.permute.xlu0 %599
  %601 = vrot.lane.b32.xlu0 %v306, 127
  %v602 = vpop.permute.xlu0 %601
  %603 = vrot.lane.b32.xlu0 %v307, 127
  %v604 = vpop.permute.xlu0 %603
  %605 = vrot.lane.b32.xlu0 %v308, 127
  %v606 = vpop.permute.xlu0 %605
  %607 = vrot.lane.b32.xlu0 %v309, 127
  %v608 = vpop.permute.xlu0 %607
  %609 = vrot.lane.b32.xlu0 %v310, 127
  %v610 = vpop.permute.xlu0 %609
  %611 = vrot.lane.b32.xlu0 %v311, 127
  %v612 = vpop.permute.xlu0 %611
  %613 = vrot.lane.b32.xlu0 %v312, 127
  %v614 = vpop.permute.xlu0 %613
  %615 = vrot.lane.b32.xlu0 %v313, 127
  %v616 = vpop.permute.xlu0 %615
  %617 = vrot.lane.b32.xlu0 %v314, 127
  %v618 = vpop.permute.xlu0 %617
  %619 = vrot.lane.b32.xlu0 %v315, 127
  %v620 = vpop.permute.xlu0 %619
  %621 = vrot.lane.b32.xlu0 %v316, 127
  %v622 = vpop.permute.xlu0 %621
  %623 = vrot.lane.b32.xlu0 %v317, 127
  %v624 = vpop.permute.xlu0 %623
  %625 = vrot.lane.b32.xlu0 %v318, 127
  %v626 = vpop.permute.xlu0 %625
  %627 = vrot.lane.b32.xlu0 %v319, 127
  %v628 = vpop.permute.xlu0 %627
  %629 = vrot.lane.b32.xlu0 %v320, 127
  %v630 = vpop.permute.xlu0 %629
  %631 = vrot.lane.b32.xlu0 %v321, 127
  %v632 = vpop.permute.xlu0 %631
  %633 = vrot.lane.b32.xlu0 %v322, 127
  %v634 = vpop.permute.xlu0 %633
  %635 = vrot.lane.b32.xlu0 %v323, 127
  %v636 = vpop.permute.xlu0 %635
  %637 = vrot.lane.b32.xlu0 %v324, 127
  %v638 = vpop.permute.xlu0 %637
  %639 = vrot.lane.b32.xlu0 %v325, 127
  %v640 = vpop.permute.xlu0 %639
  %641 = vrot.lane.b32.xlu0 %v326, 127
  %v642 = vpop.permute.xlu0 %641
  %643 = vrot.lane.b32.xlu0 %v327, 127
  %v644 = vpop.permute.xlu0 %643
  %645 = vrot.lane.b32.xlu0 %v328, 127
  %v646 = vpop.permute.xlu0 %645
  %647 = vrot.lane.b32.xlu0 %v329, 127
  %v648 = vpop.permute.xlu0 %647
  %649 = vrot.lane.b32.xlu0 %v330, 127
  %v650 = vpop.permute.xlu0 %649
  %651 = vrot.lane.b32.xlu0 %v331, 127
  %v652 = vpop.permute.xlu0 %651
  %653 = vrot.lane.b32.xlu0 %v332, 127
  %v654 = vpop.permute.xlu0 %653
  %655 = vrot.lane.b32.xlu0 %v333, 127
  %v656 = vpop.permute.xlu0 %655
  %657 = vrot.lane.b32.xlu0 %v334, 127
  %v658 = vpop.permute.xlu0 %657
  %659 = vrot.lane.b32.xlu0 %v335, 127
  %v660 = vpop.permute.xlu0 %659
  %661 = vrot.lane.b32.xlu0 %v336, 127
  %v662 = vpop.permute.xlu0 %661
  %663 = vrot.lane.b32.xlu0 %v337, 127
  %v664 = vpop.permute.xlu0 %663
  %665 = vrot.lane.b32.xlu0 %v338, 127
  %v666 = vpop.permute.xlu0 %665
  %667 = vrot.lane.b32.xlu0 %v339, 127
  %v668 = vpop.permute.xlu0 %667
  %669 = vrot.lane.b32.xlu0 %v340, 127
  %v670 = vpop.permute.xlu0 %669
  %671 = vrot.lane.b32.xlu0 %v341, 127
  %v672 = vpop.permute.xlu0 %671
  %673 = vrot.lane.b32.xlu0 %v342, 127
  %v674 = vpop.permute.xlu0 %673
  %675 = vrot.lane.b32.xlu0 %v343, 127
  %v676 = vpop.permute.xlu0 %675
  %677 = vrot.lane.b32.xlu0 %v344, 127
  %v678 = vpop.permute.xlu0 %677
  %679 = vrot.lane.b32.xlu0 %v345, 127
  %v680 = vpop.permute.xlu0 %679
  %681 = vrot.lane.b32.xlu0 %v346, 127
  %v682 = vpop.permute.xlu0 %681
  %683 = vrot.lane.b32.xlu0 %v347, 127
  %v684 = vpop.permute.xlu0 %683
  %685 = vrot.lane.b32.xlu0 %v348, 127
  %v686 = vpop.permute.xlu0 %685
  %687 = vrot.lane.b32.xlu0 %v349, 127
  %v688 = vpop.permute.xlu0 %687
  %689 = vrot.lane.b32.xlu0 %v350, 127
  %v690 = vpop.permute.xlu0 %689
  %691 = vrot.lane.b32.xlu0 %v351, 127
  %v692 = vpop.permute.xlu0 %691
  %693 = vrot.lane.b32.xlu0 %v352, 127
  %v694 = vpop.permute.xlu0 %693
  %695 = vrot.lane.b32.xlu0 %v353, 127
  %v696 = vpop.permute.xlu0 %695
  %697 = vrot.lane.b32.xlu0 %v354, 127
  %v698 = vpop.permute.xlu0 %697
  %699 = vrot.lane.b32.xlu0 %v355, 127
  %v700 = vpop.permute.xlu0 %699
  %701 = vrot.lane.b32.xlu0 %v356, 127
  %v702 = vpop.permute.xlu0 %701
  %703 = vrot.lane.b32.xlu0 %v357, 127
  %v704 = vpop.permute.xlu0 %703
  %705 = vrot.lane.b32.xlu0 %v358, 127
  %v706 = vpop.permute.xlu0 %705
  %707 = vrot.lane.b32.xlu0 %v359, 127
  %v708 = vpop.permute.xlu0 %707
  %709 = vrot.lane.b32.xlu0 %v360, 127
  %v710 = vpop.permute.xlu0 %709
  %711 = vrot.lane.b32.xlu0 %v361, 127
  %v712 = vpop.permute.xlu0 %711
  %713 = vrot.lane.b32.xlu0 %v362, 127
  %v714 = vpop.permute.xlu0 %713
  %715 = vrot.lane.b32.xlu0 %v363, 127
  %v716 = vpop.permute.xlu0 %715
  %717 = vrot.lane.b32.xlu0 %v364, 127
  %v718 = vpop.permute.xlu0 %717
  %719 = vrot.lane.b32.xlu0 %v365, 127
  %v720 = vpop.permute.xlu0 %719
  %721 = vrot.lane.b32.xlu0 %v366, 127
  %v722 = vpop.permute.xlu0 %721
  %723 = vrot.lane.b32.xlu0 %v367, 127
  %v724 = vpop.permute.xlu0 %723
  %725 = vrot.lane.b32.xlu0 %v368, 127
  %v726 = vpop.permute.xlu0 %725
  %727 = vrot.lane.b32.xlu0 %v369, 127
  %v728 = vpop.permute.xlu0 %727
  %729 = vrot.lane.b32.xlu0 %v370, 127
  %v730 = vpop.permute.xlu0 %729
  %731 = vrot.lane.b32.xlu0 %v371, 127
  %v732 = vpop.permute.xlu0 %731
  %733 = vrot.lane.b32.xlu0 %v372, 127
  %v734 = vpop.permute.xlu0 %733
  %735 = vrot.lane.b32.xlu0 %v373, 127
  %v736 = vpop.permute.xlu0 %735
  %737 = vrot.lane.b32.xlu0 %v374, 127
  %v738 = vpop.permute.xlu0 %737
  %739 = vrot.lane.b32.xlu0 %v375, 127
  %v740 = vpop.permute.xlu0 %739
  %741 = vrot.lane.b32.xlu0 %v376, 127
  %v742 = vpop.permute.xlu0 %741
  %743 = vrot.lane.b32.xlu0 %v377, 127
  %v744 = vpop.permute.xlu0 %743
  %745 = vrot.lane.b32.xlu0 %v378, 127
  %v746 = vpop.permute.xlu0 %745
  %747 = vrot.lane.b32.xlu0 %v379, 127
  %v748 = vpop.permute.xlu0 %747
  %749 = vrot.lane.b32.xlu0 %v380, 127
  %v750 = vpop.permute.xlu0 %749
  %751 = vrot.lane.b32.xlu0 %v381, 127
  %v752 = vpop.permute.xlu0 %751
  %753 = vrot.lane.b32.xlu0 %v382, 127
  %v754 = vpop.permute.xlu0 %753
  %755 = vrot.lane.b32.xlu0 %v383, 127
  %v756 = vpop.permute.xlu0 %755
  %757 = vrot.lane.b32.xlu0 %v384, 127
  %v758 = vpop.permute.xlu0 %757
  %759 = vrot.lane.b32.xlu0 %v385, 127
  %v760 = vpop.permute.xlu0 %759
  %761 = vrot.lane.b32.xlu0 %v386, 127
  %v762 = vpop.permute.xlu0 %761
  %763 = vrot.lane.b32.xlu0 %v387, 127
  %v764 = vpop.permute.xlu0 %763
  %765 = vrot.lane.b32.xlu0 %v388, 127
  %v766 = vpop.permute.xlu0 %765
  %767 = vrot.lane.b32.xlu0 %v389, 127
  %v768 = vpop.permute.xlu0 %767
  %769 = vrot.lane.b32.xlu0 %v390, 127
  %v770 = vpop.permute.xlu0 %769
  %771 = vrot.lane.b32.xlu0 %v391, 127
  %v772 = vpop.permute.xlu0 %771
  %773 = vrot.lane.b32.xlu0 %v392, 127
  %v774 = vpop.permute.xlu0 %773
  %775 = vrot.lane.b32.xlu0 %v393, 127
  %v776 = vpop.permute.xlu0 %775
  %777 = vrot.lane.b32.xlu0 %v394, 127
  %v778 = vpop.permute.xlu0 %777
  %907 = vst.msk [vmem:[%s2] sm:$0xff] %vm138, %v524
  %908 = vst.msk [vmem:[%s2 + $0x8] sm:$0xff] %vm138, %v526
  %909 = vst.msk [vmem:[%s2 + $0x10] sm:$0xff] %vm138, %v528
  %910 = vst.msk [vmem:[%s2 + $0x18] sm:$0xff] %vm138, %v530
  %911 = vst.msk [vmem:[%s2 + $0x20] sm:$0xff] %vm138, %v532
  %912 = vst.msk [vmem:[%s2 + $0x28] sm:$0xff] %vm138, %v534
  %913 = vst.msk [vmem:[%s2 + $0x30] sm:$0xff] %vm138, %v536
  %914 = vst.msk [vmem:[%s2 + $0x38] sm:$0xff] %vm138, %v538
  %915 = vst.msk [vmem:[%s2 + $0x40] sm:$0xff] %vm138, %v540
  %916 = vst.msk [vmem:[%s2 + $0x48] sm:$0xff] %vm138, %v542
  %917 = vst.msk [vmem:[%s2 + $0x50] sm:$0xff] %vm138, %v544
  %918 = vst.msk [vmem:[%s2 + $0x58] sm:$0xff] %vm138, %v546
  %919 = vst.msk [vmem:[%s2 + $0x60] sm:$0xff] %vm138, %v548
  %920 = vst.msk [vmem:[%s2 + $0x68] sm:$0xff] %vm138, %v550
  %921 = vst.msk [vmem:[%s2 + $0x70] sm:$0xff] %vm138, %v552
  %922 = vst.msk [vmem:[%s2 + $0x78] sm:$0xff] %vm138, %v554
  %923 = vst.msk [vmem:[%s2 + $0x80] sm:$0xff] %vm138, %v556
  %924 = vst.msk [vmem:[%s2 + $0x88] sm:$0xff] %vm138, %v558
  %925 = vst.msk [vmem:[%s2 + $0x90] sm:$0xff] %vm138, %v560
  %926 = vst.msk [vmem:[%s2 + $0x98] sm:$0xff] %vm138, %v562
  %927 = vst.msk [vmem:[%s2 + $0xa0] sm:$0xff] %vm138, %v564
  %928 = vst.msk [vmem:[%s2 + $0xa8] sm:$0xff] %vm138, %v566
  %929 = vst.msk [vmem:[%s2 + $0xb0] sm:$0xff] %vm138, %v568
  %930 = vst.msk [vmem:[%s2 + $0xb8] sm:$0xff] %vm138, %v570
  %931 = vst.msk [vmem:[%s2 + $0xc0] sm:$0xff] %vm138, %v572
  %932 = vst.msk [vmem:[%s2 + $0xc8] sm:$0xff] %vm138, %v574
  %933 = vst.msk [vmem:[%s2 + $0xd0] sm:$0xff] %vm138, %v576
  %934 = vst.msk [vmem:[%s2 + $0xd8] sm:$0xff] %vm138, %v578
  %935 = vst.msk [vmem:[%s2 + $0xe0] sm:$0xff] %vm138, %v580
  %936 = vst.msk [vmem:[%s2 + $0xe8] sm:$0xff] %vm138, %v582
  %937 = vst.msk [vmem:[%s2 + $0xf0] sm:$0xff] %vm138, %v584
  %938 = vst.msk [vmem:[%s2 + $0xf8] sm:$0xff] %vm138, %v586
  %939 = vst.msk [vmem:[%s2 + $0x100] sm:$0xff] %vm138, %v588
  %940 = vst.msk [vmem:[%s2 + $0x108] sm:$0xff] %vm138, %v590
  %941 = vst.msk [vmem:[%s2 + $0x110] sm:$0xff] %vm138, %v592
  %942 = vst.msk [vmem:[%s2 + $0x118] sm:$0xff] %vm138, %v594
  %943 = vst.msk [vmem:[%s2 + $0x120] sm:$0xff] %vm138, %v596
  %944 = vst.msk [vmem:[%s2 + $0x128] sm:$0xff] %vm138, %v598
  %945 = vst.msk [vmem:[%s2 + $0x130] sm:$0xff] %vm138, %v600
  %946 = vst.msk [vmem:[%s2 + $0x138] sm:$0xff] %vm138, %v602
  %947 = vst.msk [vmem:[%s2 + $0x140] sm:$0xff] %vm138, %v604
  %948 = vst.msk [vmem:[%s2 + $0x148] sm:$0xff] %vm138, %v606
  %949 = vst.msk [vmem:[%s2 + $0x150] sm:$0xff] %vm138, %v608
  %950 = vst.msk [vmem:[%s2 + $0x158] sm:$0xff] %vm138, %v610
  %951 = vst.msk [vmem:[%s2 + $0x160] sm:$0xff] %vm138, %v612
  %952 = vst.msk [vmem:[%s2 + $0x168] sm:$0xff] %vm138, %v614
  %953 = vst.msk [vmem:[%s2 + $0x170] sm:$0xff] %vm138, %v616
  %954 = vst.msk [vmem:[%s2 + $0x178] sm:$0xff] %vm138, %v618
  %955 = vst.msk [vmem:[%s2 + $0x180] sm:$0xff] %vm138, %v620
  %956 = vst.msk [vmem:[%s2 + $0x188] sm:$0xff] %vm138, %v622
  %957 = vst.msk [vmem:[%s2 + $0x190] sm:$0xff] %vm138, %v624
  %958 = vst.msk [vmem:[%s2 + $0x198] sm:$0xff] %vm138, %v626
  %959 = vst.msk [vmem:[%s2 + $0x1a0] sm:$0xff] %vm138, %v628
  %960 = vst.msk [vmem:[%s2 + $0x1a8] sm:$0xff] %vm138, %v630
  %961 = vst.msk [vmem:[%s2 + $0x1b0] sm:$0xff] %vm138, %v632
  %962 = vst.msk [vmem:[%s2 + $0x1b8] sm:$0xff] %vm138, %v634
  %963 = vst.msk [vmem:[%s2 + $0x1c0] sm:$0xff] %vm138, %v636
  %964 = vst.msk [vmem:[%s2 + $0x1c8] sm:$0xff] %vm138, %v638
  %965 = vst.msk [vmem:[%s2 + $0x1d0] sm:$0xff] %vm138, %v640
  %966 = vst.msk [vmem:[%s2 + $0x1d8] sm:$0xff] %vm138, %v642
  %967 = vst.msk [vmem:[%s2 + $0x1e0] sm:$0xff] %vm138, %v644
  %968 = vst.msk [vmem:[%s2 + $0x1e8] sm:$0xff] %vm138, %v646
  %969 = vst.msk [vmem:[%s2 + $0x1f0] sm:$0xff] %vm138, %v648
  %970 = vst.msk [vmem:[%s2 + $0x1f8] sm:$0xff] %vm138, %v650
  %971 = vst.msk [vmem:[%s2 + $0x200] sm:$0xff] %vm138, %v652
  %972 = vst.msk [vmem:[%s2 + $0x208] sm:$0xff] %vm138, %v654
  %973 = vst.msk [vmem:[%s2 + $0x210] sm:$0xff] %vm138, %v656
  %974 = vst.msk [vmem:[%s2 + $0x218] sm:$0xff] %vm138, %v658
  %975 = vst.msk [vmem:[%s2 + $0x220] sm:$0xff] %vm138, %v660
  %976 = vst.msk [vmem:[%s2 + $0x228] sm:$0xff] %vm138, %v662
  %977 = vst.msk [vmem:[%s2 + $0x230] sm:$0xff] %vm138, %v664
  %978 = vst.msk [vmem:[%s2 + $0x238] sm:$0xff] %vm138, %v666
  %979 = vst.msk [vmem:[%s2 + $0x240] sm:$0xff] %vm138, %v668
  %980 = vst.msk [vmem:[%s2 + $0x248] sm:$0xff] %vm138, %v670
  %981 = vst.msk [vmem:[%s2 + $0x250] sm:$0xff] %vm138, %v672
  %982 = vst.msk [vmem:[%s2 + $0x258] sm:$0xff] %vm138, %v674
  %983 = vst.msk [vmem:[%s2 + $0x260] sm:$0xff] %vm138, %v676
  %984 = vst.msk [vmem:[%s2 + $0x268] sm:$0xff] %vm138, %v678
  %985 = vst.msk [vmem:[%s2 + $0x270] sm:$0xff] %vm138, %v680
  %986 = vst.msk [vmem:[%s2 + $0x278] sm:$0xff] %vm138, %v682
  %987 = vst.msk [vmem:[%s2 + $0x280] sm:$0xff] %vm138, %v684
  %988 = vst.msk [vmem:[%s2 + $0x288] sm:$0xff] %vm138, %v686
  %989 = vst.msk [vmem:[%s2 + $0x290] sm:$0xff] %vm138, %v688
  %990 = vst.msk [vmem:[%s2 + $0x298] sm:$0xff] %vm138, %v690
  %991 = vst.msk [vmem:[%s2 + $0x2a0] sm:$0xff] %vm138, %v692
  %992 = vst.msk [vmem:[%s2 + $0x2a8] sm:$0xff] %vm138, %v694
  %993 = vst.msk [vmem:[%s2 + $0x2b0] sm:$0xff] %vm138, %v696
  %994 = vst.msk [vmem:[%s2 + $0x2b8] sm:$0xff] %vm138, %v698
  %995 = vst.msk [vmem:[%s2 + $0x2c0] sm:$0xff] %vm138, %v700
  %996 = vst.msk [vmem:[%s2 + $0x2c8] sm:$0xff] %vm138, %v702
  %997 = vst.msk [vmem:[%s2 + $0x2d0] sm:$0xff] %vm138, %v704
  %998 = vst.msk [vmem:[%s2 + $0x2d8] sm:$0xff] %vm138, %v706
  %999 = vst.msk [vmem:[%s2 + $0x2e0] sm:$0xff] %vm138, %v708
  %1000 = vst.msk [vmem:[%s2 + $0x2e8] sm:$0xff] %vm138, %v710
  %1001 = vst.msk [vmem:[%s2 + $0x2f0] sm:$0xff] %vm138, %v712
  %1002 = vst.msk [vmem:[%s2 + $0x2f8] sm:$0xff] %vm138, %v714
  %1003 = vst.msk [vmem:[%s2 + $0x300] sm:$0xff] %vm138, %v716
  %1004 = vst.msk [vmem:[%s2 + $0x308] sm:$0xff] %vm138, %v718
  %1005 = vst.msk [vmem:[%s2 + $0x310] sm:$0xff] %vm138, %v720
  %1006 = vst.msk [vmem:[%s2 + $0x318] sm:$0xff] %vm138, %v722
  %1007 = vst.msk [vmem:[%s2 + $0x320] sm:$0xff] %vm138, %v724
  %1008 = vst.msk [vmem:[%s2 + $0x328] sm:$0xff] %vm138, %v726
  %1009 = vst.msk [vmem:[%s2 + $0x330] sm:$0xff] %vm138, %v728
  %1010 = vst.msk [vmem:[%s2 + $0x338] sm:$0xff] %vm138, %v730
  %1011 = vst.msk [vmem:[%s2 + $0x340] sm:$0xff] %vm138, %v732
  %1012 = vst.msk [vmem:[%s2 + $0x348] sm:$0xff] %vm138, %v734
  %1013 = vst.msk [vmem:[%s2 + $0x350] sm:$0xff] %vm138, %v736
  %1014 = vst.msk [vmem:[%s2 + $0x358] sm:$0xff] %vm138, %v738
  %1015 = vst.msk [vmem:[%s2 + $0x360] sm:$0xff] %vm138, %v740
  %1016 = vst.msk [vmem:[%s2 + $0x368] sm:$0xff] %vm138, %v742
  %1017 = vst.msk [vmem:[%s2 + $0x370] sm:$0xff] %vm138, %v744
  %1018 = vst.msk [vmem:[%s2 + $0x378] sm:$0xff] %vm138, %v746
  %1019 = vst.msk [vmem:[%s2 + $0x380] sm:$0xff] %vm138, %v748
  %1020 = vst.msk [vmem:[%s2 + $0x388] sm:$0xff] %vm138, %v750
  %1021 = vst.msk [vmem:[%s2 + $0x390] sm:$0xff] %vm138, %v752
  %1022 = vst.msk [vmem:[%s2 + $0x398] sm:$0xff] %vm138, %v754
  %1023 = vst.msk [vmem:[%s2 + $0x3a0] sm:$0xff] %vm138, %v756
  %1024 = vst.msk [vmem:[%s2 + $0x3a8] sm:$0xff] %vm138, %v758
  %1025 = vst.msk [vmem:[%s2 + $0x3b0] sm:$0xff] %vm138, %v760
  %1026 = vst.msk [vmem:[%s2 + $0x3b8] sm:$0xff] %vm138, %v762
  %1027 = vst.msk [vmem:[%s2 + $0x3c0] sm:$0xff] %vm138, %v764
  %1028 = vst.msk [vmem:[%s2 + $0x3c8] sm:$0xff] %vm138, %v766
  %1029 = vst.msk [vmem:[%s2 + $0x3d0] sm:$0xff] %vm138, %v768
  %1030 = vst.msk [vmem:[%s2 + $0x3d8] sm:$0xff] %vm138, %v770
  %1031 = vst.msk [vmem:[%s2 + $0x3e0] sm:$0xff] %vm138, %v772
  %1032 = vst.msk [vmem:[%s2 + $0x3e8] sm:$0xff] %vm138, %v774
  %1033 = vst.msk [vmem:[%s2 + $0x3f0] sm:$0xff] %vm138, %v776
  %1034 = vst.msk [vmem:[%s2 + $0x3f8] sm:$0xff] %vm138, %v778
  // Predicated region
  $region6: #{splitting_forward.1} parent=0 // pred_check
    _
  $region7: #{splitting_forward.1} parent=0 // pred_check_branch
    %1036 = sbr.rel (0) target = $region9
  $region8: #{splitting_forward.1} parent=0 // pred_region
    _
  $region9: #{splitting_forward.1} parent=0 // pred_fallthru
    _
  // Predicated region
  $region10: #{splitting_forward.1} parent=0 // pred_check
    _
  $region11: #{splitting_forward.1} parent=0 // pred_check_branch
    %1038 = sbr.rel (0) target = $region13
  $region12: #{splitting_forward.1} parent=0 // pred_region
    _
  $region13: #{splitting_forward.1} parent=0 // pred_fallthru
    _
  // Predicated region
  $region14: #{splitting_forward.1} parent=0 // pred_check
    _
  $region15: #{splitting_forward.1} parent=0 // pred_check_branch
    %1040 = sbr.rel (0) target = $region17
  $region16: #{splitting_forward.1} parent=0 // pred_region
    _
  $region17: #{splitting_forward.1} parent=0 // pred_fallthru
    _
  // Predicated region
  $region18: #{splitting_forward.1} parent=0 // pred_check
    _
  $region19: #{splitting_forward.1} parent=0 // pred_check_branch
    %1042 = sbr.rel (0) target = $region21
  $region20: #{splitting_forward.1} parent=0 // pred_region
    _
  $region21: #{splitting_forward.1} parent=0 // pred_fallthru
    _

</llo_original>
